<compile_context>
chip_gen: v5e
topology: v5e:2x2
jax: 0.10.0
libtpu: 0.0.40
codegen_flags: <defaults>
</compile_context>

<pallas_src>
from functools import lru_cache, partial

import numpy as np
import jax
import jax.numpy as jnp
from jax.experimental import pallas as pl
from jax.experimental.pallas import tpu as pltpu


# ----------------------------------------------------------------------------
# Host-side constants (hoisted out of the kernel, cached per embed_dim)
# ----------------------------------------------------------------------------
def make_frequencies(embed_dim: int) -> jnp.ndarray:
    """Angular frequencies, shape (1, embed_dim // 2) (matches PyTorch buffer)."""
    i = jnp.arange(embed_dim // 2, dtype=jnp.float32)
    omega = 1.0 / (10000.0 ** (2.0 * i / embed_dim))
    return omega.reshape(1, -1)


@lru_cache(maxsize=None)
def _encoding_const(embed_dim: int) -> jnp.ndarray:
    """(2, D) constant: row 0 = interleaved omega, row 1 = phase offset.

    sin(x + 0)    on even columns
    sin(x + pi/2) on odd  columns == cos(x)   (single transcendental/element)
    """
    half = embed_dim // 2
    i = np.arange(half, dtype=np.float32)
    omega = (1.0 / (10000.0 ** (2.0 * i / embed_dim))).astype(np.float32)
    omega_full = np.repeat(omega, 2)                                    # (D,)
    offset = np.tile(np.array([0.0, np.pi / 2.0], np.float32), half)    # (D,)
    return jnp.asarray(np.stack([omega_full, offset], axis=0))          # (2, D)


# ----------------------------------------------------------------------------
# Kernel
# ----------------------------------------------------------------------------
def _sinusoidal_kernel(t_ref, const_ref, out_ref, *, pack: int, embed_dim: int):
    # t_ref:     (TB, pack)       float32 -- `pack` original rows per tile row
    # const_ref: (2, embed_dim)   float32 -- resident [omega; phase offset]
    # out_ref:   (TB, pack*D)     out_dtype (lane-dense packed output)
    omega = const_ref[0:1, :]      # (1, D)
    offset = const_ref[1:2, :]     # (1, D)
    for j in range(pack):          # static unroll; pack == 1 for D >= 128
        arg = t_ref[:, j:j + 1] * omega + offset
        out_ref[:, j * embed_dim:(j + 1) * embed_dim] = (
            jnp.sin(arg).astype(out_ref.dtype))


# ----------------------------------------------------------------------------
# VMEM-budget-aware tile sizing
# ----------------------------------------------------------------------------
_MIN_BLOCKS = 2        # >=2 blocks lets ("parallel",) use both v7x TensorCores
_SMALL_BYPASS_ELEMENTS = 1 << 16   # below this, pallas_call overhead dominates


@lru_cache(maxsize=None)
def _vmem_capacity_bytes() -> int:
    try:
        cap = int(getattr(pltpu.get_tpu_info(), "vmem_capacity_bytes", 0))
        if cap > 0:
            return cap
    except Exception:
        pass
    return 64 * 1024 * 1024        # conservative fallback (v7x per-TC VMEM)


def _round_up(x: int, m: int) -> int:
    return ((x + m - 1) // m) * m


def _choose_tile_rows(total_rows: int, row_bytes: int, buf_budget: int):
    """Returns (tile_rows, padded_rows, num_blocks)."""
    rows_by_vmem = max(8, (buf_budget // row_bytes) // 8 * 8)
    if total_rows < _MIN_BLOCKS * 8:
        # Tiny problem: single full-extent block (always layout-legal).
        return total_rows, total_rows, 1
    # Aim for at least _MIN_BLOCKS blocks, but never exceed the VMEM budget.
    target = _round_up(pl.cdiv(total_rows, _MIN_BLOCKS), 8)
    tb = max(8, min(rows_by_vmem, target))
    n_blocks = pl.cdiv(total_rows, tb)
    return tb, n_blocks * tb, n_blocks


# ----------------------------------------------------------------------------
# Wrapper (forward pass)
# ----------------------------------------------------------------------------
def sinusoidal_encoding(t: jnp.ndarray, embed_dim: int, *,
                        out_dtype=jnp.float32,
                        force_pallas: bool = False) -> jnp.ndarray:
    """Pallas-backed forward pass of SinusoidalEncoding."""
    embed_dim = abs(int(embed_dim))          # matches the PyTorch module
    if embed_dim < 2:
        raise ValueError("At least two embedding dimensions required")
    if embed_dim % 2 != 0:
        raise ValueError("Dimensionality has to be an even number")

    t = jnp.asarray(t, jnp.float32)
    if t.size == 1:
        t = t.reshape(1, 1)
    elif t.ndim != 2 or t.shape[1] != 1:
        raise ValueError("Invalid shape encountered: {}".format(t.shape))

    batch = t.shape[0]
    const = _encoding_const(embed_dim)                                   # (2, D)

    # Small-problem bypass: fused XLA expression beats kernel launch overhead.
    if not force_pallas and batch * embed_dim < _SMALL_BYPASS_ELEMENTS:
        return jnp.sin(t * const[0:1, :] + const[1:2, :]).astype(out_dtype)

    # Lane-dense packing for narrow embeddings: view row-major (B, D) output
    # as (B/pack, pack*D) so the last dim is >= 128 lanes (unmasked stores,
    # dense HBM writeback).  Pure reinterpretation -- no data movement.
    if embed_dim < 128 and 128 % embed_dim == 0:
        pack = 128 // embed_dim
    else:
        pack = 1
    width = pack * embed_dim

    out_bytes = np.dtype(out_dtype).itemsize
    vmem_cap = _vmem_capacity_bytes()
    buf_budget = max(2 << 20, min(12 << 20, vmem_cap // 10))  # per out buffer
    vmem_limit = int(min(vmem_cap // 2, 64 << 20))

    total_rows = pl.cdiv(batch, pack)
    tb, padded_rows, n_blocks = _choose_tile_rows(
        total_rows, width * out_bytes, buf_budget)
    padded_batch = padded_rows * pack

    t_in = t if padded_batch == batch else jnp.pad(
        t, ((0, padded_batch - batch), (0, 0)))
    t_in = t_in.reshape(padded_rows, pack)

    out_packed = pl.pallas_call(
        partial(_sinusoidal_kernel, pack=pack, embed_dim=embed_dim),
        out_shape=jax.ShapeDtypeStruct((padded_rows, width), out_dtype),
        grid_spec=pltpu.PrefetchScalarGridSpec(
            num_scalar_prefetch=0,
            grid=(n_blocks,),
            in_specs=[
                pl.BlockSpec((tb, pack), lambda i: (i, 0)),        # t tile
                pl.BlockSpec((2, embed_dim), lambda i: (0, 0)),    # resident consts
            ],
            out_specs=pl.BlockSpec((tb, width), lambda i: (i, 0)),
        ),
        compiler_params=pltpu.CompilerParams(
            dimension_semantics=("parallel",),   # shards batch tiles across v7x TCs
            vmem_limit_bytes=vmem_limit,
        ),
    )(t_in, const)

    out = out_packed.reshape(padded_batch, embed_dim)
    return out if padded_batch == batch else out[:batch]


# ----------------------------------------------------------------------------
# Pure-JAX reference (exact PyTorch semantics: explicit sin/cos interleave)
# ----------------------------------------------------------------------------
def _reference(t: jnp.ndarray, embed_dim: int) -> jnp.ndarray:
    t = jnp.asarray(t, jnp.float32).reshape(-1, 1)
    omega = make_frequencies(embed_dim)                                  # (1, D/2)
    emb = jnp.zeros((t.shape[0], embed_dim), jnp.float32)
    emb = emb.at[:, 0::2].set(jnp.sin(omega * t))
    emb = emb.at[:, 1::2].set(jnp.cos(omega * t))
    return emb


if __name__ == "__main__":
    key = jax.random.PRNGKey(0)

    # 1) Small module-like case (B=8, D=32): dispatches to the fused-JAX bypass.
    t_small = jax.random.uniform(key, (8, 1), jnp.float32, minval=0.0, maxval=100.0)
    emb_small = jax.block_until_ready(sinusoidal_encoding(t_small, 32))
    assert emb_small.shape == (8, 32)
    assert jnp.allclose(emb_small, _reference(t_small, 32), atol=1e-4, rtol=1e-5)

    # 2) Same small case forced through the Pallas kernel (lane-packed, pack=4).
    emb_small_p = jax.block_until_ready(
        sinusoidal_encoding(t_small, 32, force_pallas=True))
    assert emb_small_p.shape == (8, 32)
    assert jnp.allclose(emb_small_p, _reference(t_small, 32), atol=1e-4, rtol=1e-5)

    # 3) D >= 128, ragged batch: tiled multi-block (>=2 blocks) padded path.
    t_big = jax.random.uniform(jax.random.fold_in(key, 1), (2056, 1), jnp.float32,
                               minval=0.0, maxval=100.0)
    emb_big = jax.block_until_ready(sinusoidal_encoding(t_big, 128))
    assert emb_big.shape == (2056, 128)
    assert jnp.allclose(emb_big, _reference(t_big, 128), atol=1e-4, rtol=1e-5)

    # 4) D < 128 with a larger batch: lane-dense packed multi-block path.
    t_pack = jax.random.uniform(jax.random.fold_in(key, 2), (4096, 1), jnp.float32,
                                minval=0.0, maxval=100.0)
    emb_pack = jax.block_until_ready(sinusoidal_encoding(t_pack, 32))
    assert emb_pack.shape == (4096, 32)
    assert jnp.allclose(emb_pack, _reference(t_pack, 32), atol=1e-4, rtol=1e-5)

    print("KERNEL_OK")
</pallas_src>

<mosaic_0001>
module attributes {stable_mosaic.version = 11 : i64} {
  func.func @_sinusoidal_kernel(%arg0: i32, %arg1: memref<2x4xf32, #tpu.memory_space<vmem>>, %arg2: memref<2x32xf32, #tpu.memory_space<vmem>>, %arg3: memref<2x128xf32, #tpu.memory_space<vmem>>) attributes {dimension_semantics = [#tpu.dimension_semantics<parallel>], iteration_bounds = array<i64: 1>, scalar_prefetch = 0 : i64, scratch_operands = 0 : i64, tpu.core_type = #tpu.core_type<tc>, window_params = [{transform_indices = @transform_0, window_bounds = array<i64: 2, 4>}, {pipeline_mode = #tpu.pipeline_mode<synchronous>, transform_indices = @transform_1, window_bounds = array<i64: 2, 32>}, {transform_indices = @transform_2, window_bounds = array<i64: 2, 128>}]} {
    %c0 = arith.constant 0 : index
    %c0_0 = arith.constant 0 : index
    %0 = vector.load %arg2[%c0, %c0_0] : memref<2x32xf32, #tpu.memory_space<vmem>>, vector<1x32xf32>
    %c1 = arith.constant 1 : index
    %c0_1 = arith.constant 0 : index
    %1 = vector.load %arg2[%c1, %c0_1] : memref<2x32xf32, #tpu.memory_space<vmem>>, vector<1x32xf32>
    %c0_2 = arith.constant 0 : index
    %c0_3 = arith.constant 0 : index
    %2 = vector.load %arg1[%c0_2, %c0_3] : memref<2x4xf32, #tpu.memory_space<vmem>>, vector<2x1xf32>
    %3 = vector.broadcast %2 : vector<2x1xf32> to vector<2x32xf32>
    %4 = vector.broadcast %0 : vector<1x32xf32> to vector<2x32xf32>
    %5 = arith.mulf %3, %4 : vector<2x32xf32>
    %6 = vector.broadcast %1 : vector<1x32xf32> to vector<2x32xf32>
    %7 = arith.addf %5, %6 : vector<2x32xf32>
    %8 = math.sin %7 : vector<2x32xf32>
    %c0_4 = arith.constant 0 : index
    %c0_5 = arith.constant 0 : index
    %9 = vector.load %arg3[%c0_4, %c0_5] : memref<2x128xf32, #tpu.memory_space<vmem>>, vector<2x32xf32>
    tpu.vector_store %arg3[%c0_4, %c0_5], %8 {strides = array<i32>} : memref<2x128xf32, #tpu.memory_space<vmem>>, vector<2x32xf32>,
    %c0_6 = arith.constant 0 : index
    %c1_7 = arith.constant 1 : index
    %10 = vector.load %arg1[%c0_6, %c1_7] : memref<2x4xf32, #tpu.memory_space<vmem>>, vector<2x1xf32>
    %11 = vector.broadcast %10 : vector<2x1xf32> to vector<2x32xf32>
    %12 = vector.broadcast %0 : vector<1x32xf32> to vector<2x32xf32>
    %13 = arith.mulf %11, %12 : vector<2x32xf32>
    %14 = vector.broadcast %1 : vector<1x32xf32> to vector<2x32xf32>
    %15 = arith.addf %13, %14 : vector<2x32xf32>
    %16 = math.sin %15 : vector<2x32xf32>
    %c0_8 = arith.constant 0 : index
    %c32 = arith.constant 32 : index
    %17 = vector.load %arg3[%c0_8, %c32] : memref<2x128xf32, #tpu.memory_space<vmem>>, vector<2x32xf32>
    tpu.vector_store %arg3[%c0_8, %c32], %16 {strides = array<i32>} : memref<2x128xf32, #tpu.memory_space<vmem>>, vector<2x32xf32>,
    %c0_9 = arith.constant 0 : index
    %c2 = arith.constant 2 : index
    %18 = vector.load %arg1[%c0_9, %c2] : memref<2x4xf32, #tpu.memory_space<vmem>>, vector<2x1xf32>
    %19 = vector.broadcast %18 : vector<2x1xf32> to vector<2x32xf32>
    %20 = vector.broadcast %0 : vector<1x32xf32> to vector<2x32xf32>
    %21 = arith.mulf %19, %20 : vector<2x32xf32>
    %22 = vector.broadcast %1 : vector<1x32xf32> to vector<2x32xf32>
    %23 = arith.addf %21, %22 : vector<2x32xf32>
    %24 = math.sin %23 : vector<2x32xf32>
    %c0_10 = arith.constant 0 : index
    %c64 = arith.constant 64 : index
    %25 = vector.load %arg3[%c0_10, %c64] : memref<2x128xf32, #tpu.memory_space<vmem>>, vector<2x32xf32>
    tpu.vector_store %arg3[%c0_10, %c64], %24 {strides = array<i32>} : memref<2x128xf32, #tpu.memory_space<vmem>>, vector<2x32xf32>,
    %c0_11 = arith.constant 0 : index
    %c3 = arith.constant 3 : index
    %26 = vector.load %arg1[%c0_11, %c3] : memref<2x4xf32, #tpu.memory_space<vmem>>, vector<2x1xf32>
    %27 = vector.broadcast %26 : vector<2x1xf32> to vector<2x32xf32>
    %28 = vector.broadcast %0 : vector<1x32xf32> to vector<2x32xf32>
    %29 = arith.mulf %27, %28 : vector<2x32xf32>
    %30 = vector.broadcast %1 : vector<1x32xf32> to vector<2x32xf32>
    %31 = arith.addf %29, %30 : vector<2x32xf32>
    %32 = math.sin %31 : vector<2x32xf32>
    %c0_12 = arith.constant 0 : index
    %c96 = arith.constant 96 : index
    %33 = vector.load %arg3[%c0_12, %c96] : memref<2x128xf32, #tpu.memory_space<vmem>>, vector<2x32xf32>
    tpu.vector_store %arg3[%c0_12, %c96], %32 {strides = array<i32>} : memref<2x128xf32, #tpu.memory_space<vmem>>, vector<2x32xf32>,
    return
  }
  func.func @transform_0(%arg0: i32) -> (i32, i32) {
    %c0_i32 = arith.constant 0 : i32
    %c0_i32_0 = arith.constant 0 : i32
    return %arg0, %c0_i32 : i32, i32
  }
  func.func @transform_1(%arg0: i32) -> (i32, i32) {
    %c0_i32 = arith.constant 0 : i32
    %c0_i32_0 = arith.constant 0 : i32
    %c0_i32_1 = arith.constant 0 : i32
    return %c0_i32, %c0_i32_0 : i32, i32
  }
  func.func @transform_2(%arg0: i32) -> (i32, i32) {
    %c0_i32 = arith.constant 0 : i32
    %c0_i32_0 = arith.constant 0 : i32
    return %arg0, %c0_i32 : i32, i32
  }
}

</mosaic_0001>

<llo_original>
// kernel: tpu_custom_call.1
$region0: #{tpu_custom_call.1}
  #allocation0 [shape = 'u32[]', space=smem, size = 0x4, offset = 0x4, fixed_abs, tag = 'smem constant byte address 0x4 - core index']
  #allocation1 [shape = 'u32[72,128]{1,0:T(1,128)}', space=vmem, size = 0x9000, scoped, tag = 'internal scratch']
  %s0 = inlined_call_operand.hbm [shape: f32[2,4], index: 0, kind: input, shape index: {}]
  %s1 = inlined_call_operand.hbm [shape: f32[2,32], index: 1, kind: input, shape index: {}]
  %s2 = inlined_call_operand.hbm [shape: f32[2,128], index: 2, kind: output, shape index: {}]
  %s3 = sld [smem:[#allocation0]]
  $region26: #{tpu_custom_call.1} parent=0
    _
  %s5 = ssub.s32 1, %s3
  %s6 = scalar_select 0, %s5, %s3
  $region1: #{tpu_custom_call.1} parent=0
    #allocation2 [shape = 'u8[1024]{0}', space=vmem, size = 0x400, scoped, tag = 'input window, operand 0, single buffered']
    #allocation3 [shape = 's32[1]{0}', space=sflag, size = 0x4, scoped, tag = 'scoped memory for tpu_custom_call.1']
    #allocation4 [shape = 's32[1]{0}', space=sflag, size = 0x4, scoped, tag = 'scoped memory for tpu_custom_call.1']
    #allocation5 [shape = 'u8[1024]{0}', space=vmem, size = 0x400, scoped, tag = 'input window, operand 1, single buffered']
    #allocation6 [shape = 's32[1]{0}', space=sflag, size = 0x4, scoped, tag = 'scoped memory for tpu_custom_call.1']
    #allocation7 [shape = 'u8[1024]{0}', space=vmem, size = 0x400, scoped, tag = 'output window, operand 0, single buffered']
    %7 = vsyncpa [#allocation3], 0
    %8 = vsyncpa [#allocation6], 0
    %9 = vsyncpa [#allocation4], 0
    // Predicated region
    $region2: #{tpu_custom_call.1} parent=1 // pred_check
      _
    $region3: #{tpu_custom_call.1} parent=1 // pred_check_branch
      %11 = sbr.rel (0) target = $region5
    $region4: #{tpu_custom_call.1} parent=1 // pred_region
      %13 = vsyncadd [#allocation3], 0
      %s15 = sshll.u32 %s0, 4
      %s16 = int_to_ptr.hbm [resolvable:$true] %s15
      %s17 = sshll.u32 [#allocation2], 4
      %s18 = int_to_ptr.vmem [resolvable:$true] %s17
      %20 = dma.hbm_to_vmem [thread:$0]  %s16, 32, %s18, [#allocation3]
    $region5: #{tpu_custom_call.1} parent=1 // pred_fallthru
      _
    // Predicated region
    $region6: #{tpu_custom_call.1} parent=1 // pred_check
      _
    $region7: #{tpu_custom_call.1} parent=1 // pred_check_branch
      %22 = sbr.rel (0) target = $region9
    $region8: #{tpu_custom_call.1} parent=1 // pred_region
      %24 = vsyncadd [#allocation6], 0
      %s26 = sshll.u32 %s1, 4
      %s27 = int_to_ptr.hbm [resolvable:$true] %s26
      %s28 = sshll.u32 [#allocation5], 4
      %s29 = int_to_ptr.vmem [resolvable:$true] %s28
      %31 = dma.hbm_to_vmem [thread:$0]  %s27, 32, %s29, [#allocation6]
    $region9: #{tpu_custom_call.1} parent=1 // pred_fallthru
      _
    // Predicated region
    $region10: #{tpu_custom_call.1} parent=1 // pred_check
      _
    $region11: #{tpu_custom_call.1} parent=1 // pred_check_branch
      %33 = sbr.rel (0) target = $region13
    $region12: #{tpu_custom_call.1} parent=1 // pred_region
      %35 = dma.done [#allocation3], 32
    $region13: #{tpu_custom_call.1} parent=1 // pred_fallthru
      _
    // Predicated region
    $region14: #{tpu_custom_call.1} parent=1 // pred_check
      _
    $region15: #{tpu_custom_call.1} parent=1 // pred_check_branch
      %37 = sbr.rel (0) target = $region17
    $region16: #{tpu_custom_call.1} parent=1 // pred_region
      %39 = dma.done [#allocation6], 32
    $region17: #{tpu_custom_call.1} parent=1 // pred_fallthru
      _
    %v40 = vld [vmem:[#allocation5] sm:$0x1]
    %v41 = vld [vmem:[#allocation5 + $0x1] sm:$0x1]
    %v42 = vld [vmem:[#allocation2] sm:$0x3]
    %44 = vset.pattern.permute.xlu0 0
    %45 = vperm.xlu0 %44, %v42
    %v46 = vpop.permute.xlu0 %45
    %v48 = vperm.slane %v40, 0
    %v49 = vmul.f32 %v46, %v48
    %v50 = vperm.slane %v41, 0
    %v51 = vadd.f32 %v49, %v50
    %v52 = vand.u32 2147483647, %v51
    %vm53 = vcmp.le.f32.partialorder %v52, 0.7853982
    %vm54 = vcmp.lt.s32.totalorder %v51, 0
    %v55 = vand.u32 %v51, 2139095040
    %v56 = vshrl.u32 %v55, 23
    %v57 = vsub.s32 %v56, 127
    %v58 = vand.u32 2147483647, %v51
    %v59 = vand.u32 %v58, 8388607
    %v60 = vor.u32 %v59, 8388608
    %v61 = vsub.s32 0, %v60
    %v62 = vadd.s32 %v57, 1
    %vm63 = vcmp.gt.s32.totalorder %v62, 0
    %v64 = vsel %vm63, %v62, 0
    %v65 = vshrl.u32 %v64, 5
    %v66 = vand.u32 %v64, 31
    %v67 = vsub.s32 32, %v66
    %v68 = vshrl.u32 683565275, %v67
    %v69 = vshll.u32 683565275, %v66
    %v70 = vshrl.u32 2475754826, %v67
    %v71 = vor.u32 %v69, %v70
    %v72 = vshll.u32 2475754826, %v66
    %v73 = vshrl.u32 2131351028, %v67
    %v74 = vor.u32 %v72, %v73
    %v75 = vshll.u32 2131351028, %v66
    %v76 = vshrl.u32 2102212464, %v67
    %v77 = vor.u32 %v75, %v76
    %v78 = vshll.u32 2102212464, %v66
    %v79 = vshrl.u32 920167782, %v67
    %v80 = vor.u32 %v78, %v79
    %v81 = vshll.u32 920167782, %v66
    %v82 = vshrl.u32 1326507024, %v67
    %v83 = vor.u32 %v81, %v82
    %vm84 = vcmp.lt.s32.totalorder %v65, 1
    %vm85 = vcmp.lt.s32.totalorder %v65, 2
    %vm86 = vcmp.lt.s32.totalorder %v65, 3
    %vm87 = vcmp.lt.s32.totalorder %v65, 4
    %v88 = vsel %vm84, %v68, %v71
    %v89 = vsel %vm87, %v77, 2102212464
    %v90 = vsel %vm86, %v74, %v89
    %v91 = vsel %vm85, %v88, %v90
    %v92 = vsel %vm84, %v71, %v74
    %v93 = vsel %vm87, %v80, 920167782
    %v94 = vsel %vm86, %v77, %v93
    %v95 = vsel %vm85, %v92, %v94
    %v96 = vsel %vm84, %v74, %v77
    %v97 = vsel %vm87, %v83, 1326507024
    %v98 = vsel %vm86, %v80, %v97
    %v99 = vsel %vm85, %v96, %v98
    %v100 = vshll.u32 %v60, 8
    %v101 = vand.u32 %v100, 65535
    %v102 = vshrl.u32 %v100, 16
    %v103 = vand.u32 %v99, 65535
    %v104 = vshrl.u32 %v99, 16
    %v105 = vmul.u32 %v101, %v103
    %v106 = vmul.u32 %v101, %v104
    %v107 = vmul.u32 %v102, %v103
    %v108 = vmul.u32 %v102, %v104
    %v109 = vshll.u32 %v106, 16
    %v110 = vshrl.u32 %v106, 16
    %v111 = vshll.u32 %v107, 16
    %v112 = vshrl.u32 %v107, 16
    %vm113 = vc.u32 %v105, %v109
    %v114 = vsel %vm113, 1, 0
    %v115 = vadd.s32 %v105, %v109
    %v116 = vadd.s32 %v108, %v114
    %vm117 = vc.u32 %v115, %v111
    %v118 = vsel %vm117, 1, 0
    %v119 = vadd.s32 %v115, %v111
    %v120 = vadd.s32 %v116, %v118
    %v121 = vadd.s32 %v120, %v110
    %v122 = vadd.s32 %v121, %v112
    %v123 = vand.u32 %v100, 65535
    %v124 = vshrl.u32 %v100, 16
    %v125 = vand.u32 %v95, 65535
    %v126 = vshrl.u32 %v95, 16
    %v127 = vmul.u32 %v123, %v125
    %v128 = vmul.u32 %v123, %v126
    %v129 = vmul.u32 %v124, %v125
    %v130 = vmul.u32 %v124, %v126
    %v131 = vshll.u32 %v128, 16
    %v132 = vshrl.u32 %v128, 16
    %v133 = vshll.u32 %v129, 16
    %v134 = vshrl.u32 %v129, 16
    %vm135 = vc.u32 %v127, %v131
    %v136 = vsel %vm135, 1, 0
    %v137 = vadd.s32 %v127, %v131
    %v138 = vadd.s32 %v130, %v136
    %vm139 = vc.u32 %v137, %v133
    %v140 = vsel %vm139, 1, 0
    %v141 = vadd.s32 %v137, %v133
    %v142 = vadd.s32 %v138, %v140
    %v143 = vadd.s32 %v142, %v132
    %v144 = vadd.s32 %v143, %v134
    %v145 = vmul.u32 %v100, %v91
    %v146 = vadd.s32 %v122, %v141
    %vm147 = vc.u32 %v122, %v141
    %v148 = vadd.s32 %v144, 1
    %v149 = vsel %vm147, %v148, %v144
    %v150 = vadd.s32 %v145, %v149
    %v151 = vadd.s32 %v150, 536870912
    %v152 = vshrl.u32 %v151, 30
    %v153 = vshll.u32 %v152, 30
    %v154 = vsub.s32 %v150, %v153
    %vm155 = vcmp.lt.s32.totalorder %v154, 0
    %v156 = vsub.s32 0, %v154
    %v157 = vsel %vm155, %v156, %v154
    %v158 = vclz %v157
    %v159 = vsub.s32 %v158, 2
    %vm160 = vcmp.gt.s32.totalorder 0, %v159
    %v161 = vsel %vm160, 0, %v159
    %v162 = vsub.s32 32, %v161
    %v163 = vshll.u32 %v154, %v161
    %v164 = vshrl.u32 %v146, %v162
    %v165 = vor.u32 %v163, %v164
    %v166 = vsub.s32 4294967266, %v161
    %v167 = vadd.s32 %v166, 127
    %v168 = vshll.u32 %v167, 23
    %v169 = vor.u32 4788187, %v168
    %v170 = vand.u32 2147483647, %v169
    %v172 = vcvt.s32.f32 %v165
    %v173 = vmul.f32 %v172, %v170
    %v174 = vxor.u32 %v173, 2147483648
    %v175 = vsel %vm54, %v174, %v173
    %v176 = vsub.s32 4, %v152
    %v177 = vsel %vm54, %v176, %v152
    %v178 = vsel %vm53, %v51, %v175
    %v179 = vsel %vm53, 0, %v177
    %v180 = vmul.f32 %v178, %v178
    %v181 = vmul.f32 %v180, -0.001358992
    %v182 = vadd.f32 %v181, 0.041655596
    %v183 = vmul.f32 %v180, %v182
    %v184 = vadd.f32 %v183, -0.4999988
    %v185 = vmul.f32 %v180, %v184
    %v186 = vadd.f32 1.0, %v185
    %v187 = vmul.f32 %v178, %v178
    %v188 = vmul.f32 %v187, -0.00019511016
    %v189 = vadd.f32 %v188, 0.008332121
    %v190 = vmul.f32 %v187, %v189
    %v191 = vadd.f32 %v190, -0.16666654
    %v192 = vmul.f32 %v187, %v191
    %v193 = vadd.f32 %v192, 1.0
    %v194 = vmul.f32 %v193, %v178
    %vm195 = vweird.f32 %v51
    %v196 = vadd.s32 %v179, 3
    %v197 = vand.u32 %v196, 3
    %vm198 = vcmp.lt.s32.totalorder %v197, 2
    %vm199 = vcmp.eq.s32.totalorder %v197, 0
    %v200 = vxor.u32 %v194, 2147483648
    %v201 = vsel %vm199, %v186, %v200
    %vm202 = vcmp.eq.s32.totalorder %v197, 2
    %v203 = vxor.u32 %v186, 2147483648
    %v204 = vsel %vm202, %v203, %v194
    %v205 = vsel %vm198, %v201, %v204
    %v206 = vsel %vm195, nan, %v205
    %vm207 = vcmask 254976
    %208 = vst.msk [vmem:[#allocation7] sm:$0x3] %vm207, %v206
    %v209 = vld [vmem:[#allocation2] sm:$0x3]
    %211 = vset.pattern.permute.xlu0 1
    %212 = vperm.xlu0 %211, %v209
    %v213 = vpop.permute.xlu0 %212
    %v215 = vmul.f32 %v213, %v48
    %v216 = vadd.f32 %v215, %v50
    %v217 = vand.u32 2147483647, %v216
    %vm218 = vcmp.le.f32.partialorder %v217, 0.7853982
    %vm219 = vcmp.lt.s32.totalorder %v216, 0
    %v220 = vand.u32 %v216, 2139095040
    %v221 = vshrl.u32 %v220, 23
    %v222 = vsub.s32 %v221, 127
    %v223 = vand.u32 2147483647, %v216
    %v224 = vand.u32 %v223, 8388607
    %v225 = vor.u32 %v224, 8388608
    %v226 = vsub.s32 0, %v225
    %v227 = vadd.s32 %v222, 1
    %vm228 = vcmp.gt.s32.totalorder %v227, 0
    %v229 = vsel %vm228, %v227, 0
    %v230 = vshrl.u32 %v229, 5
    %v231 = vand.u32 %v229, 31
    %v232 = vsub.s32 32, %v231
    %v233 = vshrl.u32 683565275, %v232
    %v234 = vshll.u32 683565275, %v231
    %v235 = vshrl.u32 2475754826, %v232
    %v236 = vor.u32 %v234, %v235
    %v237 = vshll.u32 2475754826, %v231
    %v238 = vshrl.u32 2131351028, %v232
    %v239 = vor.u32 %v237, %v238
    %v240 = vshll.u32 2131351028, %v231
    %v241 = vshrl.u32 2102212464, %v232
    %v242 = vor.u32 %v240, %v241
    %v243 = vshll.u32 2102212464, %v231
    %v244 = vshrl.u32 920167782, %v232
    %v245 = vor.u32 %v243, %v244
    %v246 = vshll.u32 920167782, %v231
    %v247 = vshrl.u32 1326507024, %v232
    %v248 = vor.u32 %v246, %v247
    %vm249 = vcmp.lt.s32.totalorder %v230, 1
    %vm250 = vcmp.lt.s32.totalorder %v230, 2
    %vm251 = vcmp.lt.s32.totalorder %v230, 3
    %vm252 = vcmp.lt.s32.totalorder %v230, 4
    %v253 = vsel %vm249, %v233, %v236
    %v254 = vsel %vm252, %v242, 2102212464
    %v255 = vsel %vm251, %v239, %v254
    %v256 = vsel %vm250, %v253, %v255
    %v257 = vsel %vm249, %v236, %v239
    %v258 = vsel %vm252, %v245, 920167782
    %v259 = vsel %vm251, %v242, %v258
    %v260 = vsel %vm250, %v257, %v259
    %v261 = vsel %vm249, %v239, %v242
    %v262 = vsel %vm252, %v248, 1326507024
    %v263 = vsel %vm251, %v245, %v262
    %v264 = vsel %vm250, %v261, %v263
    %v265 = vshll.u32 %v225, 8
    %v266 = vand.u32 %v265, 65535
    %v267 = vshrl.u32 %v265, 16
    %v268 = vand.u32 %v264, 65535
    %v269 = vshrl.u32 %v264, 16
    %v270 = vmul.u32 %v266, %v268
    %v271 = vmul.u32 %v266, %v269
    %v272 = vmul.u32 %v267, %v268
    %v273 = vmul.u32 %v267, %v269
    %v274 = vshll.u32 %v271, 16
    %v275 = vshrl.u32 %v271, 16
    %v276 = vshll.u32 %v272, 16
    %v277 = vshrl.u32 %v272, 16
    %vm278 = vc.u32 %v270, %v274
    %v279 = vsel %vm278, 1, 0
    %v280 = vadd.s32 %v270, %v274
    %v281 = vadd.s32 %v273, %v279
    %vm282 = vc.u32 %v280, %v276
    %v283 = vsel %vm282, 1, 0
    %v284 = vadd.s32 %v280, %v276
    %v285 = vadd.s32 %v281, %v283
    %v286 = vadd.s32 %v285, %v275
    %v287 = vadd.s32 %v286, %v277
    %v288 = vand.u32 %v265, 65535
    %v289 = vshrl.u32 %v265, 16
    %v290 = vand.u32 %v260, 65535
    %v291 = vshrl.u32 %v260, 16
    %v292 = vmul.u32 %v288, %v290
    %v293 = vmul.u32 %v288, %v291
    %v294 = vmul.u32 %v289, %v290
    %v295 = vmul.u32 %v289, %v291
    %v296 = vshll.u32 %v293, 16
    %v297 = vshrl.u32 %v293, 16
    %v298 = vshll.u32 %v294, 16
    %v299 = vshrl.u32 %v294, 16
    %vm300 = vc.u32 %v292, %v296
    %v301 = vsel %vm300, 1, 0
    %v302 = vadd.s32 %v292, %v296
    %v303 = vadd.s32 %v295, %v301
    %vm304 = vc.u32 %v302, %v298
    %v305 = vsel %vm304, 1, 0
    %v306 = vadd.s32 %v302, %v298
    %v307 = vadd.s32 %v303, %v305
    %v308 = vadd.s32 %v307, %v297
    %v309 = vadd.s32 %v308, %v299
    %v310 = vmul.u32 %v265, %v256
    %v311 = vadd.s32 %v287, %v306
    %vm312 = vc.u32 %v287, %v306
    %v313 = vadd.s32 %v309, 1
    %v314 = vsel %vm312, %v313, %v309
    %v315 = vadd.s32 %v310, %v314
    %v316 = vadd.s32 %v315, 536870912
    %v317 = vshrl.u32 %v316, 30
    %v318 = vshll.u32 %v317, 30
    %v319 = vsub.s32 %v315, %v318
    %vm320 = vcmp.lt.s32.totalorder %v319, 0
    %v321 = vsub.s32 0, %v319
    %v322 = vsel %vm320, %v321, %v319
    %v323 = vclz %v322
    %v324 = vsub.s32 %v323, 2
    %vm325 = vcmp.gt.s32.totalorder 0, %v324
    %v326 = vsel %vm325, 0, %v324
    %v327 = vsub.s32 32, %v326
    %v328 = vshll.u32 %v319, %v326
    %v329 = vshrl.u32 %v311, %v327
    %v330 = vor.u32 %v328, %v329
    %v331 = vsub.s32 4294967266, %v326
    %v332 = vadd.s32 %v331, 127
    %v333 = vshll.u32 %v332, 23
    %v334 = vor.u32 4788187, %v333
    %v335 = vand.u32 2147483647, %v334
    %v337 = vcvt.s32.f32 %v330
    %v338 = vmul.f32 %v337, %v335
    %v339 = vxor.u32 %v338, 2147483648
    %v340 = vsel %vm219, %v339, %v338
    %v341 = vsub.s32 4, %v317
    %v342 = vsel %vm219, %v341, %v317
    %v343 = vsel %vm218, %v216, %v340
    %v344 = vsel %vm218, 0, %v342
    %v345 = vmul.f32 %v343, %v343
    %v346 = vmul.f32 %v345, -0.001358992
    %v347 = vadd.f32 %v346, 0.041655596
    %v348 = vmul.f32 %v345, %v347
    %v349 = vadd.f32 %v348, -0.4999988
    %v350 = vmul.f32 %v345, %v349
    %v351 = vadd.f32 1.0, %v350
    %v352 = vmul.f32 %v343, %v343
    %v353 = vmul.f32 %v352, -0.00019511016
    %v354 = vadd.f32 %v353, 0.008332121
    %v355 = vmul.f32 %v352, %v354
    %v356 = vadd.f32 %v355, -0.16666654
    %v357 = vmul.f32 %v352, %v356
    %v358 = vadd.f32 %v357, 1.0
    %v359 = vmul.f32 %v358, %v343
    %vm360 = vweird.f32 %v216
    %v361 = vadd.s32 %v344, 3
    %v362 = vand.u32 %v361, 3
    %vm363 = vcmp.lt.s32.totalorder %v362, 2
    %vm364 = vcmp.eq.s32.totalorder %v362, 0
    %v365 = vxor.u32 %v359, 2147483648
    %v366 = vsel %vm364, %v351, %v365
    %vm367 = vcmp.eq.s32.totalorder %v362, 2
    %v368 = vxor.u32 %v351, 2147483648
    %v369 = vsel %vm367, %v368, %v359
    %v370 = vsel %vm363, %v366, %v369
    %v371 = vsel %vm360, nan, %v370
    %373 = vrot.lane.b32.xlu0 %v371, 32
    %v374 = vpop.permute.xlu0 %373
    %vm376 = vcmask 517376
    %377 = vst.msk [vmem:[#allocation7] sm:$0x3] %vm376, %v374
    %v378 = vld [vmem:[#allocation2] sm:$0x3]
    %380 = vset.pattern.permute.xlu0 2
    %381 = vperm.xlu0 %380, %v378
    %v382 = vpop.permute.xlu0 %381
    %v384 = vmul.f32 %v382, %v48
    %v385 = vadd.f32 %v384, %v50
    %v386 = vand.u32 2147483647, %v385
    %vm387 = vcmp.le.f32.partialorder %v386, 0.7853982
    %vm388 = vcmp.lt.s32.totalorder %v385, 0
    %v389 = vand.u32 %v385, 2139095040
    %v390 = vshrl.u32 %v389, 23
    %v391 = vsub.s32 %v390, 127
    %v392 = vand.u32 2147483647, %v385
    %v393 = vand.u32 %v392, 8388607
    %v394 = vor.u32 %v393, 8388608
    %v395 = vsub.s32 0, %v394
    %v396 = vadd.s32 %v391, 1
    %vm397 = vcmp.gt.s32.totalorder %v396, 0
    %v398 = vsel %vm397, %v396, 0
    %v399 = vshrl.u32 %v398, 5
    %v400 = vand.u32 %v398, 31
    %v401 = vsub.s32 32, %v400
    %v402 = vshrl.u32 683565275, %v401
    %v403 = vshll.u32 683565275, %v400
    %v404 = vshrl.u32 2475754826, %v401
    %v405 = vor.u32 %v403, %v404
    %v406 = vshll.u32 2475754826, %v400
    %v407 = vshrl.u32 2131351028, %v401
    %v408 = vor.u32 %v406, %v407
    %v409 = vshll.u32 2131351028, %v400
    %v410 = vshrl.u32 2102212464, %v401
    %v411 = vor.u32 %v409, %v410
    %v412 = vshll.u32 2102212464, %v400
    %v413 = vshrl.u32 920167782, %v401
    %v414 = vor.u32 %v412, %v413
    %v415 = vshll.u32 920167782, %v400
    %v416 = vshrl.u32 1326507024, %v401
    %v417 = vor.u32 %v415, %v416
    %vm418 = vcmp.lt.s32.totalorder %v399, 1
    %vm419 = vcmp.lt.s32.totalorder %v399, 2
    %vm420 = vcmp.lt.s32.totalorder %v399, 3
    %vm421 = vcmp.lt.s32.totalorder %v399, 4
    %v422 = vsel %vm418, %v402, %v405
    %v423 = vsel %vm421, %v411, 2102212464
    %v424 = vsel %vm420, %v408, %v423
    %v425 = vsel %vm419, %v422, %v424
    %v426 = vsel %vm418, %v405, %v408
    %v427 = vsel %vm421, %v414, 920167782
    %v428 = vsel %vm420, %v411, %v427
    %v429 = vsel %vm419, %v426, %v428
    %v430 = vsel %vm418, %v408, %v411
    %v431 = vsel %vm421, %v417, 1326507024
    %v432 = vsel %vm420, %v414, %v431
    %v433 = vsel %vm419, %v430, %v432
    %v434 = vshll.u32 %v394, 8
    %v435 = vand.u32 %v434, 65535
    %v436 = vshrl.u32 %v434, 16
    %v437 = vand.u32 %v433, 65535
    %v438 = vshrl.u32 %v433, 16
    %v439 = vmul.u32 %v435, %v437
    %v440 = vmul.u32 %v435, %v438
    %v441 = vmul.u32 %v436, %v437
    %v442 = vmul.u32 %v436, %v438
    %v443 = vshll.u32 %v440, 16
    %v444 = vshrl.u32 %v440, 16
    %v445 = vshll.u32 %v441, 16
    %v446 = vshrl.u32 %v441, 16
    %vm447 = vc.u32 %v439, %v443
    %v448 = vsel %vm447, 1, 0
    %v449 = vadd.s32 %v439, %v443
    %v450 = vadd.s32 %v442, %v448
    %vm451 = vc.u32 %v449, %v445
    %v452 = vsel %vm451, 1, 0
    %v453 = vadd.s32 %v449, %v445
    %v454 = vadd.s32 %v450, %v452
    %v455 = vadd.s32 %v454, %v444
    %v456 = vadd.s32 %v455, %v446
    %v457 = vand.u32 %v434, 65535
    %v458 = vshrl.u32 %v434, 16
    %v459 = vand.u32 %v429, 65535
    %v460 = vshrl.u32 %v429, 16
    %v461 = vmul.u32 %v457, %v459
    %v462 = vmul.u32 %v457, %v460
    %v463 = vmul.u32 %v458, %v459
    %v464 = vmul.u32 %v458, %v460
    %v465 = vshll.u32 %v462, 16
    %v466 = vshrl.u32 %v462, 16
    %v467 = vshll.u32 %v463, 16
    %v468 = vshrl.u32 %v463, 16
    %vm469 = vc.u32 %v461, %v465
    %v470 = vsel %vm469, 1, 0
    %v471 = vadd.s32 %v461, %v465
    %v472 = vadd.s32 %v464, %v470
    %vm473 = vc.u32 %v471, %v467
    %v474 = vsel %vm473, 1, 0
    %v475 = vadd.s32 %v471, %v467
    %v476 = vadd.s32 %v472, %v474
    %v477 = vadd.s32 %v476, %v466
    %v478 = vadd.s32 %v477, %v468
    %v479 = vmul.u32 %v434, %v425
    %v480 = vadd.s32 %v456, %v475
    %vm481 = vc.u32 %v456, %v475
    %v482 = vadd.s32 %v478, 1
    %v483 = vsel %vm481, %v482, %v478
    %v484 = vadd.s32 %v479, %v483
    %v485 = vadd.s32 %v484, 536870912
    %v486 = vshrl.u32 %v485, 30
    %v487 = vshll.u32 %v486, 30
    %v488 = vsub.s32 %v484, %v487
    %vm489 = vcmp.lt.s32.totalorder %v488, 0
    %v490 = vsub.s32 0, %v488
    %v491 = vsel %vm489, %v490, %v488
    %v492 = vclz %v491
    %v493 = vsub.s32 %v492, 2
    %vm494 = vcmp.gt.s32.totalorder 0, %v493
    %v495 = vsel %vm494, 0, %v493
    %v496 = vsub.s32 32, %v495
    %v497 = vshll.u32 %v488, %v495
    %v498 = vshrl.u32 %v480, %v496
    %v499 = vor.u32 %v497, %v498
    %v500 = vsub.s32 4294967266, %v495
    %v501 = vadd.s32 %v500, 127
    %v502 = vshll.u32 %v501, 23
    %v503 = vor.u32 4788187, %v502
    %v504 = vand.u32 2147483647, %v503
    %v506 = vcvt.s32.f32 %v499
    %v507 = vmul.f32 %v506, %v504
    %v508 = vxor.u32 %v507, 2147483648
    %v509 = vsel %vm388, %v508, %v507
    %v510 = vsub.s32 4, %v486
    %v511 = vsel %vm388, %v510, %v486
    %v512 = vsel %vm387, %v385, %v509
    %v513 = vsel %vm387, 0, %v511
    %v514 = vmul.f32 %v512, %v512
    %v515 = vmul.f32 %v514, -0.001358992
    %v516 = vadd.f32 %v515, 0.041655596
    %v517 = vmul.f32 %v514, %v516
    %v518 = vadd.f32 %v517, -0.4999988
    %v519 = vmul.f32 %v514, %v518
    %v520 = vadd.f32 1.0, %v519
    %v521 = vmul.f32 %v512, %v512
    %v522 = vmul.f32 %v521, -0.00019511016
    %v523 = vadd.f32 %v522, 0.008332121
    %v524 = vmul.f32 %v521, %v523
    %v525 = vadd.f32 %v524, -0.16666654
    %v526 = vmul.f32 %v521, %v525
    %v527 = vadd.f32 %v526, 1.0
    %v528 = vmul.f32 %v527, %v512
    %vm529 = vweird.f32 %v385
    %v530 = vadd.s32 %v513, 3
    %v531 = vand.u32 %v530, 3
    %vm532 = vcmp.lt.s32.totalorder %v531, 2
    %vm533 = vcmp.eq.s32.totalorder %v531, 0
    %v534 = vxor.u32 %v528, 2147483648
    %v535 = vsel %vm533, %v520, %v534
    %vm536 = vcmp.eq.s32.totalorder %v531, 2
    %v537 = vxor.u32 %v520, 2147483648
    %v538 = vsel %vm536, %v537, %v528
    %v539 = vsel %vm532, %v535, %v538
    %v540 = vsel %vm529, nan, %v539
    %542 = vrot.lane.b32.xlu0 %v540, 64
    %v543 = vpop.permute.xlu0 %542
    %vm545 = vcmask 779776
    %546 = vst.msk [vmem:[#allocation7] sm:$0x3] %vm545, %v543
    %v547 = vld [vmem:[#allocation2] sm:$0x3]
    %549 = vset.pattern.permute.xlu0 3
    %550 = vperm.xlu0 %549, %v547
    %v551 = vpop.permute.xlu0 %550
    %v553 = vmul.f32 %v551, %v48
    %v554 = vadd.f32 %v553, %v50
    %v555 = vand.u32 2147483647, %v554
    %vm556 = vcmp.le.f32.partialorder %v555, 0.7853982
    %vm557 = vcmp.lt.s32.totalorder %v554, 0
    %v558 = vand.u32 %v554, 2139095040
    %v559 = vshrl.u32 %v558, 23
    %v560 = vsub.s32 %v559, 127
    %v561 = vand.u32 2147483647, %v554
    %v562 = vand.u32 %v561, 8388607
    %v563 = vor.u32 %v562, 8388608
    %v564 = vsub.s32 0, %v563
    %v565 = vadd.s32 %v560, 1
    %vm566 = vcmp.gt.s32.totalorder %v565, 0
    %v567 = vsel %vm566, %v565, 0
    %v568 = vshrl.u32 %v567, 5
    %v569 = vand.u32 %v567, 31
    %v570 = vsub.s32 32, %v569
    %v571 = vshrl.u32 683565275, %v570
    %v572 = vshll.u32 683565275, %v569
    %v573 = vshrl.u32 2475754826, %v570
    %v574 = vor.u32 %v572, %v573
    %v575 = vshll.u32 2475754826, %v569
    %v576 = vshrl.u32 2131351028, %v570
    %v577 = vor.u32 %v575, %v576
    %v578 = vshll.u32 2131351028, %v569
    %v579 = vshrl.u32 2102212464, %v570
    %v580 = vor.u32 %v578, %v579
    %v581 = vshll.u32 2102212464, %v569
    %v582 = vshrl.u32 920167782, %v570
    %v583 = vor.u32 %v581, %v582
    %v584 = vshll.u32 920167782, %v569
    %v585 = vshrl.u32 1326507024, %v570
    %v586 = vor.u32 %v584, %v585
    %vm587 = vcmp.lt.s32.totalorder %v568, 1
    %vm588 = vcmp.lt.s32.totalorder %v568, 2
    %vm589 = vcmp.lt.s32.totalorder %v568, 3
    %vm590 = vcmp.lt.s32.totalorder %v568, 4
    %v591 = vsel %vm587, %v571, %v574
    %v592 = vsel %vm590, %v580, 2102212464
    %v593 = vsel %vm589, %v577, %v592
    %v594 = vsel %vm588, %v591, %v593
    %v595 = vsel %vm587, %v574, %v577
    %v596 = vsel %vm590, %v583, 920167782
    %v597 = vsel %vm589, %v580, %v596
    %v598 = vsel %vm588, %v595, %v597
    %v599 = vsel %vm587, %v577, %v580
    %v600 = vsel %vm590, %v586, 1326507024
    %v601 = vsel %vm589, %v583, %v600
    %v602 = vsel %vm588, %v599, %v601
    %v603 = vshll.u32 %v563, 8
    %v604 = vand.u32 %v603, 65535
    %v605 = vshrl.u32 %v603, 16
    %v606 = vand.u32 %v602, 65535
    %v607 = vshrl.u32 %v602, 16
    %v608 = vmul.u32 %v604, %v606
    %v609 = vmul.u32 %v604, %v607
    %v610 = vmul.u32 %v605, %v606
    %v611 = vmul.u32 %v605, %v607
    %v612 = vshll.u32 %v609, 16
    %v613 = vshrl.u32 %v609, 16
    %v614 = vshll.u32 %v610, 16
    %v615 = vshrl.u32 %v610, 16
    %vm616 = vc.u32 %v608, %v612
    %v617 = vsel %vm616, 1, 0
    %v618 = vadd.s32 %v608, %v612
    %v619 = vadd.s32 %v611, %v617
    %vm620 = vc.u32 %v618, %v614
    %v621 = vsel %vm620, 1, 0
    %v622 = vadd.s32 %v618, %v614
    %v623 = vadd.s32 %v619, %v621
    %v624 = vadd.s32 %v623, %v613
    %v625 = vadd.s32 %v624, %v615
    %v626 = vand.u32 %v603, 65535
    %v627 = vshrl.u32 %v603, 16
    %v628 = vand.u32 %v598, 65535
    %v629 = vshrl.u32 %v598, 16
    %v630 = vmul.u32 %v626, %v628
    %v631 = vmul.u32 %v626, %v629
    %v632 = vmul.u32 %v627, %v628
    %v633 = vmul.u32 %v627, %v629
    %v634 = vshll.u32 %v631, 16
    %v635 = vshrl.u32 %v631, 16
    %v636 = vshll.u32 %v632, 16
    %v637 = vshrl.u32 %v632, 16
    %vm638 = vc.u32 %v630, %v634
    %v639 = vsel %vm638, 1, 0
    %v640 = vadd.s32 %v630, %v634
    %v641 = vadd.s32 %v633, %v639
    %vm642 = vc.u32 %v640, %v636
    %v643 = vsel %vm642, 1, 0
    %v644 = vadd.s32 %v640, %v636
    %v645 = vadd.s32 %v641, %v643
    %v646 = vadd.s32 %v645, %v635
    %v647 = vadd.s32 %v646, %v637
    %v648 = vmul.u32 %v603, %v594
    %v649 = vadd.s32 %v625, %v644
    %vm650 = vc.u32 %v625, %v644
    %v651 = vadd.s32 %v647, 1
    %v652 = vsel %vm650, %v651, %v647
    %v653 = vadd.s32 %v648, %v652
    %v654 = vadd.s32 %v653, 536870912
    %v655 = vshrl.u32 %v654, 30
    %v656 = vshll.u32 %v655, 30
    %v657 = vsub.s32 %v653, %v656
    %vm658 = vcmp.lt.s32.totalorder %v657, 0
    %v659 = vsub.s32 0, %v657
    %v660 = vsel %vm658, %v659, %v657
    %v661 = vclz %v660
    %v662 = vsub.s32 %v661, 2
    %vm663 = vcmp.gt.s32.totalorder 0, %v662
    %v664 = vsel %vm663, 0, %v662
    %v665 = vsub.s32 32, %v664
    %v666 = vshll.u32 %v657, %v664
    %v667 = vshrl.u32 %v649, %v665
    %v668 = vor.u32 %v666, %v667
    %v669 = vsub.s32 4294967266, %v664
    %v670 = vadd.s32 %v669, 127
    %v671 = vshll.u32 %v670, 23
    %v672 = vor.u32 4788187, %v671
    %v673 = vand.u32 2147483647, %v672
    %v675 = vcvt.s32.f32 %v668
    %v676 = vmul.f32 %v675, %v673
    %v677 = vxor.u32 %v676, 2147483648
    %v678 = vsel %vm557, %v677, %v676
    %v679 = vsub.s32 4, %v655
    %v680 = vsel %vm557, %v679, %v655
    %v681 = vsel %vm556, %v554, %v678
    %v682 = vsel %vm556, 0, %v680
    %v683 = vmul.f32 %v681, %v681
    %v684 = vmul.f32 %v683, -0.001358992
    %v685 = vadd.f32 %v684, 0.041655596
    %v686 = vmul.f32 %v683, %v685
    %v687 = vadd.f32 %v686, -0.4999988
    %v688 = vmul.f32 %v683, %v687
    %v689 = vadd.f32 1.0, %v688
    %v690 = vmul.f32 %v681, %v681
    %v691 = vmul.f32 %v690, -0.00019511016
    %v692 = vadd.f32 %v691, 0.008332121
    %v693 = vmul.f32 %v690, %v692
    %v694 = vadd.f32 %v693, -0.16666654
    %v695 = vmul.f32 %v690, %v694
    %v696 = vadd.f32 %v695, 1.0
    %v697 = vmul.f32 %v696, %v681
    %vm698 = vweird.f32 %v554
    %v699 = vadd.s32 %v682, 3
    %v700 = vand.u32 %v699, 3
    %vm701 = vcmp.lt.s32.totalorder %v700, 2
    %vm702 = vcmp.eq.s32.totalorder %v700, 0
    %v703 = vxor.u32 %v697, 2147483648
    %v704 = vsel %vm702, %v689, %v703
    %vm705 = vcmp.eq.s32.totalorder %v700, 2
    %v706 = vxor.u32 %v689, 2147483648
    %v707 = vsel %vm705, %v706, %v697
    %v708 = vsel %vm701, %v704, %v707
    %v709 = vsel %vm698, nan, %v708
    %711 = vrot.lane.b32.xlu0 %v709, 96
    %v712 = vpop.permute.xlu0 %711
    %vm714 = vcmask 1042176
    %715 = vst.msk [vmem:[#allocation7] sm:$0x3] %vm714, %v712
    // Predicated region
    $region18: #{tpu_custom_call.1} parent=1 // pred_check
      _
    $region19: #{tpu_custom_call.1} parent=1 // pred_check_branch
      %717 = sbr.rel (0) target = $region21
    $region20: #{tpu_custom_call.1} parent=1 // pred_region
      %719 = vsyncadd [#allocation4], 0
      %s721 = sshll.u32 [#allocation7], 4
      %s722 = int_to_ptr.vmem [resolvable:$true] %s721
      %s723 = sshll.u32 %s2, 4
      %s724 = int_to_ptr.hbm [resolvable:$true] %s723
      %726 = dma.vmem_to_hbm [thread:$0]  %s722, 32, %s724, [#allocation4]
    $region21: #{tpu_custom_call.1} parent=1 // pred_fallthru
      _
    // Predicated region
    $region22: #{tpu_custom_call.1} parent=1 // pred_check
      _
    $region23: #{tpu_custom_call.1} parent=1 // pred_check_branch
      %728 = sbr.rel (0) target = $region25
    $region24: #{tpu_custom_call.1} parent=1 // pred_region
      %730 = dma.done [#allocation4], 32
    $region25: #{tpu_custom_call.1} parent=1 // pred_fallthru
      _
    %731 = vsyncpa [#allocation3], 1
    %732 = vsyncpa [#allocation6], 1
    %733 = vsyncpa [#allocation4], 1

</llo_original>
